<compile_context>
chip_gen: v7x
topology: tpu7x:2x2x1
jax: 0.10.0
libtpu: 0.0.40
codegen_flags: <defaults>
</compile_context>

<pallas_src>
import functools

import jax
import jax.numpy as jnp
from jax.experimental import pallas as pl
from jax.experimental.pallas import tpu as pltpu

LANE = 128
SUBLANE = 8


def _round_up(x, m):
    return (x + m - 1) // m * m


def _vmem_capacity_bytes():
    try:
        return int(pltpu.get_tpu_info().vmem_capacity_bytes)
    except Exception:
        return 64 << 20          # conservative fallback: v7x per-TC VMEM


def cnn_kernel(filter_sizes, group,
               ids_ref, tab_ref, wbig_ref, cbias_ref, fcw_ref, fcb_ref,
               out_ref):
    """One batch tile.

    ids_ref  : [TB, S]              int32  token ids (this tile)
    tab_ref  : [V_pad, D]           bf16   embedding table (VMEM resident)
    wbig_ref : [D, n_shifts*group]  bf16   packed conv weights, one
                                           128-lane-aligned group per
                                           (branch, shift)
    cbias_ref: [NB, group]          f32    conv biases (lane-padded, zeros)
    fcw_ref  : [NB*group, OUT_PAD]  bf16   fc weight (row/lane padded, zeros)
    fcb_ref  : [1, OUT_PAD]         f32    fc bias (lane padded)
    out_ref  : [TB, OUT_PAD]        f32
    """
    TB, S = ids_ref.shape
    V_pad = tab_ref.shape[0]

    # ---- in-kernel embedding gather: one-hot MXU matmul (exact row select) --
    ids = ids_ref[...]                                              # [TB, S]
    iota_v = jax.lax.broadcasted_iota(jnp.int32, (TB, S, V_pad), 2)
    onehot = (ids[:, :, None] == iota_v).astype(jnp.bfloat16)       # [TB,S,Vp]
    emb = jax.lax.dot_general(
        onehot, tab_ref[...],
        dimension_numbers=(((2,), (0,)), ((), ())),
        preferred_element_type=jnp.float32).astype(jnp.bfloat16)    # [TB,S,D]

    # ---- one wide MXU matmul covering every (branch, shift) group -----------
    #   y[:, t, g*group + c] = sum_d emb[:, t, d] * W_shift_g[d, c]
    y = jax.lax.dot_general(
        emb, wbig_ref[...],
        dimension_numbers=(((2,), (0,)), ((), ())),
        preferred_element_type=jnp.float32)                         # [TB,S,C]
    # TODO(synk): for long sequences, chunk this matmul over S with an online
    # max-pool instead of materializing y for the whole tile.

    pooled_parts = []
    g = 0
    for idx, fs in enumerate(filter_sizes):
        Lp = S - fs + 1
        # Shift-add of 128-lane-aligned column groups; init with slice 0
        # (no zeros + extra add).  Time offsets 1..fs-1 are small,
        # accepted after the lane-alignment fix.
        acc = y[:, 0:Lp, g * group:(g + 1) * group]
        g += 1
        for k in range(1, fs):
            acc = acc + y[:, k:k + Lp, g * group:(g + 1) * group]
            g += 1
        # Max-pool the RAW conv sums, then bias + ReLU on [TB, group] only
        # (bias constant over time, ReLU monotone => identical result).
        pooled = jnp.max(acc, axis=1)                               # [TB,group]
        pooled = jnp.maximum(pooled + cbias_ref[idx:idx + 1, :], 0.0)
        pooled_parts.append(pooled.astype(jnp.bfloat16))

    # Concatenation + fc fused as ONE matmul; padded rows/lanes of fcw are 0.
    pooled_all = jnp.concatenate(pooled_parts, axis=-1)             # [TB,NB*g]
    out = jnp.dot(pooled_all, fcw_ref[...],
                  preferred_element_type=jnp.float32) + fcb_ref[...]
    # TODO(synk): nn.Dropout is identity at inference time; no RNG applied.
    out_ref[...] = out


def cnn_forward(tokens, params, filter_sizes, *, batch_tile=None):
    """tokens: int32 [seq_len, batch] (matches PyTorch `text` pre-permute)."""
    emb_table = params["embedding"]                      # [V, D] f32
    F = params["conv0_w"].shape[-1]
    out_dim = params["fc_b"].shape[-1]
    V, D = emb_table.shape
    NB = len(filter_sizes)
    n_shifts = sum(filter_sizes)

    text = tokens.T                                      # permute(1,0) -> [B,S]
    B, S = text.shape
    assert S >= max(filter_sizes), "sequence shorter than largest filter size"

    GROUP = _round_up(F, LANE)                           # lane-aligned group
    OUT_PAD = _round_up(out_dim, LANE)
    V_pad = _round_up(V, LANE)
    C_pad = n_shifts * GROUP

    # bf16 embedding table padded to a lane multiple of rows (padding rows are
    # zero and never indexed).  bf16 is a deliberate accuracy decision.
    emb_tab = jnp.pad(emb_table, ((0, V_pad - V), (0, 0))).astype(jnp.bfloat16)
    # TODO(synk): production-size vocabularies that do not fit VMEM need a
    # wrapper-side gather or a DMA gather from an HBM-resident table instead.

    # ---- pack conv weights: one 128-lane group per (branch, shift) ----------
    w_cols = []
    for i, fs in enumerate(filter_sizes):
        w = params[f"conv{i}_w"]                         # [fs, D, F]
        for k in range(fs):
            w_cols.append(jnp.pad(w[k], ((0, 0), (0, GROUP - F))))  # [D,GROUP]
    w_big = jnp.concatenate(w_cols, axis=-1).astype(jnp.bfloat16)   # [D,C_pad]

    cbias = jnp.concatenate(
        [jnp.pad(params[f"conv{i}_b"], ((0, 0), (0, GROUP - F)))
         for i in range(NB)], axis=0).astype(jnp.float32)           # [NB,GROUP]

    # FC weight rows placed at i*GROUP .. i*GROUP+F-1 so the lane-concat of
    # per-branch pooled blocks hits the right rows; padding is zero.
    fcw = params["fc_w"].reshape(NB, F, out_dim)
    fcw = jnp.pad(fcw, ((0, 0), (0, GROUP - F), (0, OUT_PAD - out_dim)))
    fcw = fcw.reshape(NB * GROUP, OUT_PAD).astype(jnp.bfloat16)
    fcb = jnp.pad(params["fc_b"],
                  ((0, 0), (0, OUT_PAD - out_dim))).astype(jnp.float32)

    # ---- per-generation VMEM sizing ------------------------------------------
    cap = _vmem_capacity_bytes()
    small_vmem = cap <= (64 << 20)                       # v7x-class parts
    tile_budget = (24 << 20) if small_vmem else (72 << 20)
    vmem_cap = (40 << 20) if small_vmem else (96 << 20)

    resident = 2 * (emb_tab.size * 2 + w_big.size * 2 + cbias.size * 4
                    + fcw.size * 2 + fcb.size * 4)
    per_row = (2 * S * 4                                 # ids (double-buffered)
               + S * V_pad * 2                           # one-hot bf16
               + S * D * 2                               # gathered emb bf16
               + S * C_pad * 4                           # wide matmul output f32
               + S * GROUP * 4                           # per-branch shift acc
               + NB * GROUP * 4                          # pooled features
               + 2 * OUT_PAD * 4)                        # out (double-buffered)

    if batch_tile is None:
        if B <= SUBLANE:
            batch_tile = B                               # block == full dim
        else:
            b8 = _round_up(B, SUBLANE)
            avail = max(tile_budget - resident, SUBLANE * per_row)
            tb = max(SUBLANE, (int(avail // per_row) // SUBLANE) * SUBLANE)
            tb = min(tb, b8)
            if tb >= b8 and b8 >= 2 * SUBLANE:
                # guarantee >= 2 grid steps so both v7x TensorCores get work
                tb = max(SUBLANE, _round_up(b8 // 2, SUBLANE))
            batch_tile = tb
    TB = batch_tile
    B_pad = _round_up(B, TB)

    ids = text.astype(jnp.int32)
    if B_pad != B:
        ids = jnp.pad(ids, ((0, B_pad - B), (0, 0)))     # padded rows = token 0

    grid = (B_pad // TB,)
    vmem_limit = int(min(max(TB * per_row + resident + (4 << 20), 8 << 20),
                         vmem_cap))

    flops = (2 * B_pad * S * V_pad * D                   # one-hot gather matmul
             + 2 * B_pad * S * D * C_pad                 # fused conv matmul
             + 2 * B_pad * NB * GROUP * OUT_PAD)         # fused fc
    bytes_accessed = (ids.size * 4 + emb_tab.size * 2 + w_big.size * 2
                      + cbias.size * 4 + fcw.size * 2 + fcb.size * 4
                      + B_pad * OUT_PAD * 4)

    kernel = functools.partial(cnn_kernel, tuple(filter_sizes), GROUP)

    out = pl.pallas_call(
        kernel,
        out_shape=jax.ShapeDtypeStruct((B_pad, OUT_PAD), jnp.float32),
        grid_spec=pltpu.PrefetchScalarGridSpec(
            num_scalar_prefetch=0,
            grid=grid,
            in_specs=[
                pl.BlockSpec((TB, S), lambda i: (i, 0)),             # ids tile
                pl.BlockSpec((V_pad, D), lambda i: (0, 0)),           # emb table
                pl.BlockSpec((D, C_pad), lambda i: (0, 0)),           # W_big
                pl.BlockSpec((NB, GROUP), lambda i: (0, 0)),          # conv bias
                pl.BlockSpec((NB * GROUP, OUT_PAD), lambda i: (0, 0)),  # fc w
                pl.BlockSpec((1, OUT_PAD), lambda i: (0, 0)),         # fc b
            ],
            out_specs=pl.BlockSpec((TB, OUT_PAD), lambda i: (i, 0)),
        ),
        compiler_params=pltpu.CompilerParams(
            dimension_semantics=("parallel",),
            vmem_limit_bytes=vmem_limit),
        cost_estimate=pl.CostEstimate(
            flops=int(flops), transcendentals=0,
            bytes_accessed=int(bytes_accessed)),
    )(ids, emb_tab, w_big, cbias, fcw, fcb)

    # Padded batch rows and padded OUT lanes hold garbage by design; this
    # slice is the invariant that keeps the result correct.
    return out[:B, :out_dim]


def init_params(key, vocab_size, embedding_dim, n_filters, filter_sizes,
                output_dim, pad_idx):
    n_keys = 1 + 2 * len(filter_sizes) + 2
    keys = jax.random.split(key, n_keys)
    ki = iter(keys)

    emb = 0.1 * jax.random.normal(next(ki), (vocab_size, embedding_dim),
                                  dtype=jnp.float32)
    emb = emb.at[pad_idx].set(0.0)                       # padding_idx row zero

    params = {"embedding": emb}
    for i, fs in enumerate(filter_sizes):
        params[f"conv{i}_w"] = 0.1 * jax.random.normal(
            next(ki), (fs, embedding_dim, n_filters), dtype=jnp.float32)
        params[f"conv{i}_b"] = 0.1 * jax.random.normal(
            next(ki), (1, n_filters), dtype=jnp.float32)

    in_features = len(filter_sizes) * n_filters
    params["fc_w"] = 0.1 * jax.random.normal(
        next(ki), (in_features, output_dim), dtype=jnp.float32)
    params["fc_b"] = 0.1 * jax.random.normal(
        next(ki), (1, output_dim), dtype=jnp.float32)
    return params


def reference_forward(tokens, params, filter_sizes):
    """Pure-JAX reference mirroring the PyTorch forward, using the same bf16
    input/weight quantization as the kernel (accumulation stays f32)."""
    bf = lambda x: x.astype(jnp.bfloat16).astype(jnp.float32)
    emb = bf(params["embedding"])[tokens.T]              # [B, S, D]
    B, S, D = emb.shape
    feats = []
    for i, fs in enumerate(filter_sizes):
        w = bf(params[f"conv{i}_w"])                     # [fs, D, F]
        b = params[f"conv{i}_b"]                         # [1, F]
        Lp = S - fs + 1
        acc = jnp.zeros((B, Lp, w.shape[-1]), jnp.float32)
        for k in range(fs):
            acc = acc + jnp.einsum("btd,df->btf", emb[:, k:k + Lp, :], w[k])
        acc = jax.nn.relu(acc + b)
        feats.append(bf(jnp.max(acc, axis=1)))
    cat = jnp.concatenate(feats, axis=-1)
    return cat @ bf(params["fc_w"]) + params["fc_b"]


if __name__ == "__main__":
    vocab_size = 50
    embedding_dim = 32
    n_filters = 8
    filter_sizes = (2, 3, 4)
    output_dim = 4
    pad_idx = 0
    seq_len, batch = 8, 2

    key = jax.random.PRNGKey(0)
    k_tok, k_par = jax.random.split(key)

    tokens = jax.random.randint(k_tok, (seq_len, batch), 0, vocab_size,
                                dtype=jnp.int32)
    params = init_params(k_par, vocab_size, embedding_dim, n_filters,
                         filter_sizes, output_dim, pad_idx)

    out = cnn_forward(tokens, params, filter_sizes)
    out = jax.block_until_ready(out)

    ref = reference_forward(tokens, params, filter_sizes)
    assert out.shape == (batch, output_dim), out.shape
    assert jnp.allclose(out, ref, atol=2e-3, rtol=2e-3), (out, ref)

    print("KERNEL_OK")
</pallas_src>

<mosaic_0001>
module attributes {stable_mosaic.version = 11 : i64} {
  func.func @cnn_kernel(%arg0: i32, %arg1: memref<2x8xi32, #tpu.memory_space<vmem>>, %arg2: memref<128x32xbf16, #tpu.memory_space<vmem>>, %arg3: memref<32x1152xbf16, #tpu.memory_space<vmem>>, %arg4: memref<3x128xf32, #tpu.memory_space<vmem>>, %arg5: memref<384x128xbf16, #tpu.memory_space<vmem>>, %arg6: memref<1x128xf32, #tpu.memory_space<vmem>>, %arg7: memref<2x128xf32, #tpu.memory_space<vmem>>) attributes {dimension_semantics = [#tpu.dimension_semantics<parallel>], iteration_bounds = array<i64: 1>, scalar_prefetch = 0 : i64, scratch_operands = 0 : i64, tpu.core_type = #tpu.core_type<tc>, window_params = [{transform_indices = @transform_0, window_bounds = array<i64: 2, 8>}, {pipeline_mode = #tpu.pipeline_mode<synchronous>, transform_indices = @transform_1, window_bounds = array<i64: 128, 32>}, {pipeline_mode = #tpu.pipeline_mode<synchronous>, transform_indices = @transform_2, window_bounds = array<i64: 32, 1152>}, {pipeline_mode = #tpu.pipeline_mode<synchronous>, transform_indices = @transform_3, window_bounds = array<i64: 3, 128>}, {pipeline_mode = #tpu.pipeline_mode<synchronous>, transform_indices = @transform_4, window_bounds = array<i64: 384, 128>}, {pipeline_mode = #tpu.pipeline_mode<synchronous>, transform_indices = @transform_5, window_bounds = array<i64: 1, 128>}, {transform_indices = @transform_6, window_bounds = array<i64: 2, 128>}]} {
    %c0 = arith.constant 0 : index
    %c0_0 = arith.constant 0 : index
    %0 = vector.load %arg1[%c0, %c0_0] : memref<2x8xi32, #tpu.memory_space<vmem>>, vector<2x8xi32>
    %1 = tpu.iota {dimensions = array<i32: 2>} : vector<2x8x128xi32>
    %2 = vector.shape_cast %0 : vector<2x8xi32> to vector<2x8x1xi32>
    %3 = vector.broadcast %2 : vector<2x8x1xi32> to vector<2x8x128xi32>
    %4 = arith.cmpi eq, %3, %1 : vector<2x8x128xi32>
    %5 = arith.extui %4 : vector<2x8x128xi1> to vector<2x8x128xi32>
    %6 = arith.sitofp %5 : vector<2x8x128xi32> to vector<2x8x128xf32>
    %7 = arith.truncf %6 : vector<2x8x128xf32> to vector<2x8x128xbf16>
    %c0_1 = arith.constant 0 : index
    %c0_2 = arith.constant 0 : index
    %8 = vector.load %arg2[%c0_1, %c0_2] : memref<128x32xbf16, #tpu.memory_space<vmem>>, vector<128x32xbf16>
    %cst = arith.constant dense<0.000000e+00> : vector<2x8x32xf32>
    %9 = tpu.matmul %7, %8, %cst {dimension_numbers = #tpu.dot_dimension_numbers<[2], [0], [0, 1], [1], [0, 0, 0, 1, 1, 1], [], []>} : vector<2x8x128xbf16>, vector<128x32xbf16>, vector<2x8x32xf32> -> vector<2x8x32xf32>
    %10 = arith.truncf %9 : vector<2x8x32xf32> to vector<2x8x32xbf16>
    %c0_3 = arith.constant 0 : index
    %c0_4 = arith.constant 0 : index
    %11 = vector.load %arg3[%c0_3, %c0_4] : memref<32x1152xbf16, #tpu.memory_space<vmem>>, vector<32x1152xbf16>
    %cst_5 = arith.constant dense<0.000000e+00> : vector<2x8x1152xf32>
    %12 = tpu.matmul %10, %11, %cst_5 {dimension_numbers = #tpu.dot_dimension_numbers<[2], [0], [0, 1], [1], [0, 0, 0, 1, 1, 1], [], []>} : vector<2x8x32xbf16>, vector<32x1152xbf16>, vector<2x8x1152xf32> -> vector<2x8x1152xf32>
    %13 = vector.extract_strided_slice %12 {offsets = [0, 0, 0], sizes = [2, 7, 128], strides = [1, 1, 1]} : vector<2x8x1152xf32> to vector<2x7x128xf32>
    %14 = vector.extract_strided_slice %12 {offsets = [0, 1, 128], sizes = [2, 7, 128], strides = [1, 1, 1]} : vector<2x8x1152xf32> to vector<2x7x128xf32>
    %15 = arith.addf %13, %14 : vector<2x7x128xf32>
    %cst_6 = arith.constant dense<0xFF800000> : vector<2x128xf32>
    %16 = vector.multi_reduction <maximumf>, %15, %cst_6 [1] : vector<2x7x128xf32> to vector<2x128xf32>
    %c0_7 = arith.constant 0 : index
    %c0_8 = arith.constant 0 : index
    %17 = vector.load %arg4[%c0_7, %c0_8] : memref<3x128xf32, #tpu.memory_space<vmem>>, vector<1x128xf32>
    %18 = vector.broadcast %17 : vector<1x128xf32> to vector<2x128xf32>
    %19 = arith.addf %16, %18 : vector<2x128xf32>
    %cst_9 = arith.constant 0.000000e+00 : f32
    %20 = vector.broadcast %cst_9 : f32 to vector<2x128xf32>
    %21 = arith.maximumf %19, %20 : vector<2x128xf32>
    %22 = arith.truncf %21 : vector<2x128xf32> to vector<2x128xbf16>
    %23 = vector.extract_strided_slice %12 {offsets = [0, 0, 256], sizes = [2, 6, 128], strides = [1, 1, 1]} : vector<2x8x1152xf32> to vector<2x6x128xf32>
    %24 = vector.extract_strided_slice %12 {offsets = [0, 1, 384], sizes = [2, 6, 128], strides = [1, 1, 1]} : vector<2x8x1152xf32> to vector<2x6x128xf32>
    %25 = arith.addf %23, %24 : vector<2x6x128xf32>
    %26 = vector.extract_strided_slice %12 {offsets = [0, 2, 512], sizes = [2, 6, 128], strides = [1, 1, 1]} : vector<2x8x1152xf32> to vector<2x6x128xf32>
    %27 = arith.addf %25, %26 : vector<2x6x128xf32>
    %cst_10 = arith.constant dense<0xFF800000> : vector<2x128xf32>
    %28 = vector.multi_reduction <maximumf>, %27, %cst_10 [1] : vector<2x6x128xf32> to vector<2x128xf32>
    %c1 = arith.constant 1 : index
    %c0_11 = arith.constant 0 : index
    %29 = vector.load %arg4[%c1, %c0_11] : memref<3x128xf32, #tpu.memory_space<vmem>>, vector<1x128xf32>
    %30 = vector.broadcast %29 : vector<1x128xf32> to vector<2x128xf32>
    %31 = arith.addf %28, %30 : vector<2x128xf32>
    %cst_12 = arith.constant 0.000000e+00 : f32
    %32 = vector.broadcast %cst_12 : f32 to vector<2x128xf32>
    %33 = arith.maximumf %31, %32 : vector<2x128xf32>
    %34 = arith.truncf %33 : vector<2x128xf32> to vector<2x128xbf16>
    %35 = vector.extract_strided_slice %12 {offsets = [0, 0, 640], sizes = [2, 5, 128], strides = [1, 1, 1]} : vector<2x8x1152xf32> to vector<2x5x128xf32>
    %36 = vector.extract_strided_slice %12 {offsets = [0, 1, 768], sizes = [2, 5, 128], strides = [1, 1, 1]} : vector<2x8x1152xf32> to vector<2x5x128xf32>
    %37 = arith.addf %35, %36 : vector<2x5x128xf32>
    %38 = vector.extract_strided_slice %12 {offsets = [0, 2, 896], sizes = [2, 5, 128], strides = [1, 1, 1]} : vector<2x8x1152xf32> to vector<2x5x128xf32>
    %39 = arith.addf %37, %38 : vector<2x5x128xf32>
    %40 = vector.extract_strided_slice %12 {offsets = [0, 3, 1024], sizes = [2, 5, 128], strides = [1, 1, 1]} : vector<2x8x1152xf32> to vector<2x5x128xf32>
    %41 = arith.addf %39, %40 : vector<2x5x128xf32>
    %cst_13 = arith.constant dense<0xFF800000> : vector<2x128xf32>
    %42 = vector.multi_reduction <maximumf>, %41, %cst_13 [1] : vector<2x5x128xf32> to vector<2x128xf32>
    %c2 = arith.constant 2 : index
    %c0_14 = arith.constant 0 : index
    %43 = vector.load %arg4[%c2, %c0_14] : memref<3x128xf32, #tpu.memory_space<vmem>>, vector<1x128xf32>
    %44 = vector.broadcast %43 : vector<1x128xf32> to vector<2x128xf32>
    %45 = arith.addf %42, %44 : vector<2x128xf32>
    %cst_15 = arith.constant 0.000000e+00 : f32
    %46 = vector.broadcast %cst_15 : f32 to vector<2x128xf32>
    %47 = arith.maximumf %45, %46 : vector<2x128xf32>
    %48 = arith.truncf %47 : vector<2x128xf32> to vector<2x128xbf16>
    %49 = tpu.concatenate %22, %34, %48 in 1 : vector<2x128xbf16>, vector<2x128xbf16>, vector<2x128xbf16> -> vector<2x384xbf16>
    %c0_16 = arith.constant 0 : index
    %c0_17 = arith.constant 0 : index
    %50 = vector.load %arg5[%c0_16, %c0_17] : memref<384x128xbf16, #tpu.memory_space<vmem>>, vector<384x128xbf16>
    %cst_18 = arith.constant dense<0.000000e+00> : vector<2x128xf32>
    %51 = tpu.matmul %49, %50, %cst_18 {dimension_numbers = #tpu.dot_dimension_numbers<[1], [0], [0], [1], [0, 0, 1, 1], [], []>} : vector<2x384xbf16>, vector<384x128xbf16>, vector<2x128xf32> -> vector<2x128xf32>
    %c0_19 = arith.constant 0 : index
    %c0_20 = arith.constant 0 : index
    %52 = vector.load %arg6[%c0_19, %c0_20] : memref<1x128xf32, #tpu.memory_space<vmem>>, vector<1x128xf32>
    %53 = vector.broadcast %52 : vector<1x128xf32> to vector<2x128xf32>
    %54 = arith.addf %51, %53 : vector<2x128xf32>
    %c0_21 = arith.constant 0 : index
    %c0_22 = arith.constant 0 : index
    %55 = vector.load %arg7[%c0_21, %c0_22] : memref<2x128xf32, #tpu.memory_space<vmem>>, vector<2x128xf32>
    tpu.vector_store %arg7[%c0_21, %c0_22], %54 {strides = array<i32>} : memref<2x128xf32, #tpu.memory_space<vmem>>, vector<2x128xf32>,
    return
  }
  func.func @transform_0(%arg0: i32) -> (i32, i32) {
    %c0_i32 = arith.constant 0 : i32
    %c0_i32_0 = arith.constant 0 : i32
    return %arg0, %c0_i32 : i32, i32
  }
  func.func @transform_1(%arg0: i32) -> (i32, i32) {
    %c0_i32 = arith.constant 0 : i32
    %c0_i32_0 = arith.constant 0 : i32
    %c0_i32_1 = arith.constant 0 : i32
    return %c0_i32, %c0_i32_0 : i32, i32
  }
  func.func @transform_2(%arg0: i32) -> (i32, i32) {
    %c0_i32 = arith.constant 0 : i32
    %c0_i32_0 = arith.constant 0 : i32
    %c0_i32_1 = arith.constant 0 : i32
    return %c0_i32, %c0_i32_0 : i32, i32
  }
  func.func @transform_3(%arg0: i32) -> (i32, i32) {
    %c0_i32 = arith.constant 0 : i32
    %c0_i32_0 = arith.constant 0 : i32
    %c0_i32_1 = arith.constant 0 : i32
    return %c0_i32, %c0_i32_0 : i32, i32
  }
  func.func @transform_4(%arg0: i32) -> (i32, i32) {
    %c0_i32 = arith.constant 0 : i32
    %c0_i32_0 = arith.constant 0 : i32
    %c0_i32_1 = arith.constant 0 : i32
    return %c0_i32, %c0_i32_0 : i32, i32
  }
  func.func @transform_5(%arg0: i32) -> (i32, i32) {
    %c0_i32 = arith.constant 0 : i32
    %c0_i32_0 = arith.constant 0 : i32
    %c0_i32_1 = arith.constant 0 : i32
    return %c0_i32, %c0_i32_0 : i32, i32
  }
  func.func @transform_6(%arg0: i32) -> (i32, i32) {
    %c0_i32 = arith.constant 0 : i32
    %c0_i32_0 = arith.constant 0 : i32
    return %arg0, %c0_i32 : i32, i32
  }
}

</mosaic_0001>

<llo_original>
// kernel: tpu_custom_call.1
$region0: #{tpu_custom_call.1}
  #allocation0 [shape = 'u32[]', space=smem, size = 0x4, offset = 0x4, fixed_abs, tag = 'smem constant byte address 0x4 - core index']
  #allocation1 [shape = 'u32[144,128]{1,0:T(1,128)}', space=vmem, size = 0x12000, scoped, tag = 'internal scratch']
  %s0 = inlined_call_operand.vmem [shape: s32[2,8], index: 0, kind: input, shape index: {}]
  %s1 = inlined_call_operand.vmem [shape: bf16[128,32], index: 1, kind: input, shape index: {}]
  %s2 = inlined_call_operand.hbm [shape: bf16[32,1152], index: 2, kind: input, shape index: {}]
  %s3 = inlined_call_operand.vmem [shape: f32[3,128], index: 3, kind: input, shape index: {}]
  %s4 = inlined_call_operand.hbm [shape: bf16[384,128], index: 4, kind: input, shape index: {}]
  %s5 = inlined_call_operand.vmem [shape: f32[1,128], index: 5, kind: input, shape index: {}]
  %s6 = inlined_call_operand.hbm [shape: f32[2,128], index: 6, kind: output, shape index: {}]
  %s7 = sld [smem:[#allocation0]]
  $region42: #{tpu_custom_call.1} parent=0
    _
  %s9 = ssub.s32 1, %s7
  %s10 = scalar_select 0, %s9, %s7
  $region1: #{tpu_custom_call.1} parent=0
    #allocation2 [shape = 'u8[73728]{0}', space=vmem, size = 0x12000, scoped, tag = 'input window, operand 2, single buffered']
    #allocation3 [shape = 's32[1]{0}', space=sflag, size = 0x4, scoped, tag = 'scoped memory for tpu_custom_call.1']
    #allocation4 [shape = 's32[1]{0}', space=sflag, size = 0x4, scoped, tag = 'scoped memory for tpu_custom_call.1']
    #allocation5 [shape = 'u8[98304]{0}', space=vmem, size = 0x18000, scoped, tag = 'input window, operand 4, single buffered']
    #allocation6 [shape = 's32[1]{0}', space=sflag, size = 0x4, scoped, tag = 'scoped memory for tpu_custom_call.1']
    #allocation7 [shape = 'u8[1024]{0}', space=vmem, size = 0x400, scoped, tag = 'output window, operand 0, single buffered']
    %11 = vsyncpa [#allocation3], 0
    %12 = vsyncpa [#allocation6], 0
    %13 = vsyncpa [#allocation4], 0
    // Predicated region
    $region2: #{tpu_custom_call.1} parent=1 // pred_check
      _
    $region3: #{tpu_custom_call.1} parent=1 // pred_check_branch
      %15 = sbr.rel (0) target = $region5
    $region4: #{tpu_custom_call.1} parent=1 // pred_region
      _
    $region5: #{tpu_custom_call.1} parent=1 // pred_fallthru
      _
    // Predicated region
    $region6: #{tpu_custom_call.1} parent=1 // pred_check
      _
    $region7: #{tpu_custom_call.1} parent=1 // pred_check_branch
      %17 = sbr.rel (0) target = $region9
    $region8: #{tpu_custom_call.1} parent=1 // pred_region
      _
    $region9: #{tpu_custom_call.1} parent=1 // pred_fallthru
      _
    // Predicated region
    $region10: #{tpu_custom_call.1} parent=1 // pred_check
      _
    $region11: #{tpu_custom_call.1} parent=1 // pred_check_branch
      %19 = sbr.rel (0) target = $region13
    $region12: #{tpu_custom_call.1} parent=1 // pred_region
      %s21 = ssub.s32 2304, 2304
      %22 = vsyncadd [#allocation3], %s21
      %s23 = sshll.u32 [#allocation2], 4
      %s24 = int_to_ptr.vmem [resolvable:$true] %s23
      %29 = dma.hbm_to_vmem [thread:$0]  %s2, 2304, %s24, [#allocation3], 576, 576, 36
    $region13: #{tpu_custom_call.1} parent=1 // pred_fallthru
      _
    // Predicated region
    $region14: #{tpu_custom_call.1} parent=1 // pred_check
      _
    $region15: #{tpu_custom_call.1} parent=1 // pred_check_branch
      %31 = sbr.rel (0) target = $region17
    $region16: #{tpu_custom_call.1} parent=1 // pred_region
      _
    $region17: #{tpu_custom_call.1} parent=1 // pred_fallthru
      _
    // Predicated region
    $region18: #{tpu_custom_call.1} parent=1 // pred_check
      _
    $region19: #{tpu_custom_call.1} parent=1 // pred_check_branch
      %33 = sbr.rel (0) target = $region21
    $region20: #{tpu_custom_call.1} parent=1 // pred_region
      %s35 = ssub.s32 3072, 3072
      %36 = vsyncadd [#allocation6], %s35
      %s37 = sshll.u32 [#allocation5], 4
      %s38 = int_to_ptr.vmem [resolvable:$true] %s37
      %43 = dma.hbm_to_vmem [thread:$0]  %s4, 3072, %s38, [#allocation6], 64, 64, 4
    $region21: #{tpu_custom_call.1} parent=1 // pred_fallthru
      _
    // Predicated region
    $region22: #{tpu_custom_call.1} parent=1 // pred_check
      _
    $region23: #{tpu_custom_call.1} parent=1 // pred_check_branch
      %45 = sbr.rel (0) target = $region25
    $region24: #{tpu_custom_call.1} parent=1 // pred_region
      _
    $region25: #{tpu_custom_call.1} parent=1 // pred_fallthru
      _
    // Predicated region
    $region26: #{tpu_custom_call.1} parent=1 // pred_check
      _
    $region27: #{tpu_custom_call.1} parent=1 // pred_check_branch
      %47 = sbr.rel (0) target = $region29
    $region28: #{tpu_custom_call.1} parent=1 // pred_region
      %48 = dma.done [#allocation3], 2304
    $region29: #{tpu_custom_call.1} parent=1 // pred_fallthru
      _
    // Predicated region
    $region30: #{tpu_custom_call.1} parent=1 // pred_check
      _
    $region31: #{tpu_custom_call.1} parent=1 // pred_check_branch
      %50 = sbr.rel (0) target = $region33
    $region32: #{tpu_custom_call.1} parent=1 // pred_region
      %51 = dma.done [#allocation6], 3072
    $region33: #{tpu_custom_call.1} parent=1 // pred_fallthru
      _
    %v53 = vld [vmem:[%s0] sm:$0x3]
    %v54 = vlaneseq
    %v55 = vand.u32 %v54, 127
    %v56 = vlaneseq
    %v57 = vshrl.u32 %v56, 7
    %v58 = vsub.s32 0, %v57
    %v59 = vrot.slane %v53, %v58
    %61 = vbcast.lane.b32.xlu0 %v59, 256
    %v62 = vpop.permute.xlu0 %61
    %v63 = vlaneseq
    %v64 = vshrl.u32 %v63, 7
    %v65 = vsub.s32 1, %v64
    %v66 = vrot.slane %v53, %v65
    %68 = vbcast.lane.b32.xlu0 %v66, 256
    %v69 = vpop.permute.xlu0 %68
    %vm70 = vcmp.eq.s32.totalorder %v62, %v55
    %vm71 = vcmp.eq.s32.totalorder %v69, %v55
    %v72 = vsel %vm70, 1, 0
    %v73 = vsel %vm71, 1, 0
    %v74 = vcvt.s32.f32 %v72
    %v75 = vcvt.s32.f32 %v73
    %v76 = vpack.c.bf16 %v74, %v74
    %v77 = vpack.c.bf16 %v75, %v75
    %v78 = vld [vmem:[%s1] sm:$0xf]
    %v79 = vld [vmem:[%s1 + $0x4] sm:$0xf]
    %v80 = vld [vmem:[%s1 + $0x8] sm:$0xf]
    %v81 = vld [vmem:[%s1 + $0xc] sm:$0xf]
    %v82 = vld [vmem:[%s1 + $0x10] sm:$0xf]
    %v83 = vld [vmem:[%s1 + $0x14] sm:$0xf]
    %v84 = vld [vmem:[%s1 + $0x18] sm:$0xf]
    %v85 = vld [vmem:[%s1 + $0x1c] sm:$0xf]
    %v86 = vld [vmem:[%s1 + $0x20] sm:$0xf]
    %v87 = vld [vmem:[%s1 + $0x24] sm:$0xf]
    %v88 = vld [vmem:[%s1 + $0x28] sm:$0xf]
    %v89 = vld [vmem:[%s1 + $0x2c] sm:$0xf]
    %v90 = vld [vmem:[%s1 + $0x30] sm:$0xf]
    %v91 = vld [vmem:[%s1 + $0x34] sm:$0xf]
    %v92 = vld [vmem:[%s1 + $0x38] sm:$0xf]
    %v93 = vld [vmem:[%s1 + $0x3c] sm:$0xf]
    %v96 = vunpack.c.l.b16 %v76
    %v97 = vunpack.c.l.b16 %v77
    %v98 = vpack.c.b16 %v97, %v96
    %v116 = vunpack.c.l.b16 %v78
    %v117 = vunpack.c.l.b16 %v79
    %v118 = vunpack.c.l.b16 %v80
    %v119 = vunpack.c.l.b16 %v81
    %v120 = vunpack.c.l.b16 %v82
    %v121 = vunpack.c.l.b16 %v83
    %v122 = vunpack.c.l.b16 %v84
    %v123 = vunpack.c.l.b16 %v85
    %v124 = vunpack.c.l.b16 %v86
    %v125 = vunpack.c.l.b16 %v87
    %v126 = vunpack.c.l.b16 %v88
    %v127 = vunpack.c.l.b16 %v89
    %v128 = vunpack.c.l.b16 %v90
    %v129 = vunpack.c.l.b16 %v91
    %v130 = vunpack.c.l.b16 %v92
    %v131 = vunpack.c.l.b16 %v93
    %v132 = vpack.c.b16 %v117, %v116
    %v133 = vpack.c.b16 %v119, %v118
    %v134 = vpack.c.b16 %v121, %v120
    %v135 = vpack.c.b16 %v123, %v122
    %v136 = vpack.c.b16 %v125, %v124
    %v137 = vpack.c.b16 %v127, %v126
    %v138 = vpack.c.b16 %v129, %v128
    %v139 = vpack.c.b16 %v131, %v130
    %148 = vmatprep.subr.bf16.mxu0 0
    %149 = vmatpush1.bf16.msra.mxu0 %v132
    %150 = vmatprep.subr.bf16.mxu0 0
    %151 = vmatpush1.bf16.msra.mxu0 %v133
    %152 = vmatprep.subr.bf16.mxu0 0
    %153 = vmatpush1.bf16.msra.mxu0 %v134
    %154 = vmatprep.subr.bf16.mxu0 0
    %155 = vmatpush1.bf16.msra.mxu0 %v135
    %156 = vmatprep.subr.bf16.mxu0 0
    %157 = vmatpush1.bf16.msra.mxu0 %v136
    %158 = vmatprep.subr.bf16.mxu0 0
    %159 = vmatpush1.bf16.msra.mxu0 %v137
    %160 = vmatprep.subr.bf16.mxu0 0
    %161 = vmatpush1.bf16.msra.mxu0 %v138
    %162 = vmatprep.subr.bf16.mxu0 0
    %163 = vmatpush1.bf16.msra.mxu0 %v139
    %164 = vmatprep.subr.bf16.mxu0 0
    %165 = vmatpush1.bf16.msra.mxu0 0
    %166 = vmatprep.subr.bf16.mxu0 0
    %167 = vmatpush1.bf16.msra.mxu0 0
    %168 = vmatprep.subr.bf16.mxu0 0
    %169 = vmatpush1.bf16.msra.mxu0 0
    %170 = vmatprep.subr.bf16.mxu0 0
    %171 = vmatpush1.bf16.msra.mxu0 0
    %172 = vmatprep.subr.bf16.mxu0 0
    %173 = vmatpush1.bf16.msra.mxu0 0
    %174 = vmatprep.subr.bf16.mxu0 0
    %175 = vmatpush1.bf16.msra.mxu0 0
    %176 = vmatprep.subr.bf16.mxu0 0
    %177 = vmatpush1.bf16.msra.mxu0 0
    %178 = vmatprep.subr.bf16.mxu0 0
    %179 = vmatpush1.bf16.msra.mxu0 0
    %180 = vmatprep.mubr.bf16.mxu0 0
    %181 = vmatmul.mubr.bf16.gmra.mrb[0].mxu0 %v98
    %v182 = vpop.f32.mrb[0].mxu0
    %v183 = vadd.f32 0.0, %v182
    %v184 = vpop.f32.mrb[0].mxu0
    %v185 = vpop.f32.mrb[0].mxu0
    %v186 = vadd.f32 0.0, %v185
    %v187 = vpop.f32.mrb[0].mxu0
    %188 = vdwg.mxu0
    %v189 = vpack.c.bf16 %v183, %v183
    %v190 = vpack.c.bf16 %v186, %v186
    %v191 = vld [vmem:[#allocation2] sm:$0xff]
    %v192 = vld [vmem:[#allocation2 + $0x8] sm:$0xff]
    %v193 = vld [vmem:[#allocation2 + $0x10] sm:$0xff]
    %v194 = vld [vmem:[#allocation2 + $0x18] sm:$0xff]
    %v195 = vld [vmem:[#allocation2 + $0x20] sm:$0xf]
    %v196 = vld [vmem:[#allocation2 + $0x24] sm:$0xff]
    %v197 = vld [vmem:[#allocation2 + $0x2c] sm:$0xff]
    %v198 = vld [vmem:[#allocation2 + $0x34] sm:$0xff]
    %v199 = vld [vmem:[#allocation2 + $0x3c] sm:$0xff]
    %v200 = vld [vmem:[#allocation2 + $0x44] sm:$0xf]
    %v201 = vld [vmem:[#allocation2 + $0x48] sm:$0xff]
    %v202 = vld [vmem:[#allocation2 + $0x50] sm:$0xff]
    %v203 = vld [vmem:[#allocation2 + $0x58] sm:$0xff]
    %v204 = vld [vmem:[#allocation2 + $0x60] sm:$0xff]
    %v205 = vld [vmem:[#allocation2 + $0x68] sm:$0xf]
    %v206 = vld [vmem:[#allocation2 + $0x6c] sm:$0xff]
    %v207 = vld [vmem:[#allocation2 + $0x74] sm:$0xff]
    %v208 = vld [vmem:[#allocation2 + $0x7c] sm:$0xff]
    %v209 = vld [vmem:[#allocation2 + $0x84] sm:$0xff]
    %v210 = vld [vmem:[#allocation2 + $0x8c] sm:$0xf]
    %v213 = vunpack.c.l.b16 %v189
    %v214 = vunpack.c.l.b16 %v190
    %v215 = vpack.c.b16 %v214, %v213
    %v236 = vunpack.c.l.b16 %v191
    %v237 = vunpack.c.h.b16 %v191
    %v238 = vunpack.c.l.b16 %v192
    %v239 = vunpack.c.h.b16 %v192
    %v240 = vunpack.c.l.b16 %v193
    %v241 = vunpack.c.h.b16 %v193
    %v242 = vunpack.c.l.b16 %v194
    %v243 = vunpack.c.h.b16 %v194
    %v244 = vunpack.c.l.b16 %v195
    %v245 = vunpack.c.l.b16 %v196
    %v246 = vunpack.c.h.b16 %v196
    %v247 = vunpack.c.l.b16 %v197
    %v248 = vunpack.c.h.b16 %v197
    %v249 = vunpack.c.l.b16 %v198
    %v250 = vunpack.c.h.b16 %v198
    %v251 = vunpack.c.l.b16 %v199
    %v252 = vunpack.c.h.b16 %v199
    %v253 = vunpack.c.l.b16 %v200
    %v254 = vunpack.c.l.b16 %v201
    %v255 = vunpack.c.h.b16 %v201
    %v256 = vunpack.c.l.b16 %v202
    %v257 = vunpack.c.h.b16 %v202
    %v258 = vunpack.c.l.b16 %v203
    %v259 = vunpack.c.h.b16 %v203
    %v260 = vunpack.c.l.b16 %v204
    %v261 = vunpack.c.h.b16 %v204
    %v262 = vunpack.c.l.b16 %v205
    %v263 = vunpack.c.l.b16 %v206
    %v264 = vunpack.c.h.b16 %v206
    %v265 = vunpack.c.l.b16 %v207
    %v266 = vunpack.c.h.b16 %v207
    %v267 = vunpack.c.l.b16 %v208
    %v268 = vunpack.c.h.b16 %v208
    %v269 = vunpack.c.l.b16 %v209
    %v270 = vunpack.c.h.b16 %v209
    %v271 = vunpack.c.l.b16 %v210
    %v272 = vpack.c.b16 %v245, %v236
    %v273 = vpack.c.b16 %v246, %v237
    %v274 = vpack.c.b16 %v247, %v238
    %v275 = vpack.c.b16 %v248, %v239
    %v276 = vpack.c.b16 %v249, %v240
    %v277 = vpack.c.b16 %v250, %v241
    %v278 = vpack.c.b16 %v251, %v242
    %v279 = vpack.c.b16 %v252, %v243
    %v280 = vpack.c.b16 %v253, %v244
    %v281 = vpack.c.b16 %v263, %v254
    %v282 = vpack.c.b16 %v264, %v255
    %v283 = vpack.c.b16 %v265, %v256
    %v284 = vpack.c.b16 %v266, %v257
    %v285 = vpack.c.b16 %v267, %v258
    %v286 = vpack.c.b16 %v268, %v259
    %v287 = vpack.c.b16 %v269, %v260
    %v288 = vpack.c.b16 %v270, %v261
    %v289 = vpack.c.b16 %v271, %v262
    %vm308 = vcmask 261120
    %v310 = vsel %vm308, %v215, 0
    %312 = vmatprep.subr.bf16.mxu0 %v273
    %313 = vmatpush1.bf16.msra.mxu0 %v272
    %314 = vmatprep.subr.bf16.mxu0 %v282
    %315 = vmatpush1.bf16.msra.mxu0 %v281
    %316 = vmatprep.subr.bf16.mxu0 0
    %317 = vmatpush1.bf16.msra.mxu0 0
    %318 = vmatprep.subr.bf16.mxu0 0
    %319 = vmatpush1.bf16.msra.mxu0 0
    %320 = vmatprep.subr.bf16.mxu0 0
    %321 = vmatpush1.bf16.msra.mxu0 0
    %322 = vmatprep.subr.bf16.mxu0 0
    %323 = vmatpush1.bf16.msra.mxu0 0
    %324 = vmatprep.subr.bf16.mxu0 0
    %325 = vmatpush1.bf16.msra.mxu0 0
    %326 = vmatprep.subr.bf16.mxu0 0
    %327 = vmatpush1.bf16.msra.mxu0 0
    %328 = vmatprep.subr.bf16.mxu0 0
    %329 = vmatpush1.bf16.msra.mxu0 0
    %330 = vmatprep.subr.bf16.mxu0 0
    %331 = vmatpush1.bf16.msra.mxu0 0
    %332 = vmatprep.subr.bf16.mxu0 0
    %333 = vmatpush1.bf16.msra.mxu0 0
    %334 = vmatprep.subr.bf16.mxu0 0
    %335 = vmatpush1.bf16.msra.mxu0 0
    %336 = vmatprep.subr.bf16.mxu0 0
    %337 = vmatpush1.bf16.msra.mxu0 0
    %338 = vmatprep.subr.bf16.mxu0 0
    %339 = vmatpush1.bf16.msra.mxu0 0
    %340 = vmatprep.subr.bf16.mxu0 0
    %341 = vmatpush1.bf16.msra.mxu0 0
    %342 = vmatprep.subr.bf16.mxu0 0
    %343 = vmatpush1.bf16.msra.mxu0 0
    %344 = vmatprep.mubr.bf16.mxu0 0
    %345 = vmatmul.mubr.bf16.gmra.mrb[0].mxu0 %v310
    %v346 = vpop.f32.mrb[0].mxu0
    %v347 = vadd.f32 0.0, %v346
    %v348 = vpop.f32.mrb[0].mxu0
    %v349 = vadd.f32 0.0, %v348
    %v350 = vpop.f32.mrb[0].mxu0
    %v351 = vadd.f32 0.0, %v350
    %v352 = vpop.f32.mrb[0].mxu0
    %v353 = vadd.f32 0.0, %v352
    %354 = vdwg.mxu0
    %355 = vmatprep.subr.bf16.mxu0 %v275
    %356 = vmatpush1.bf16.msra.mxu0 %v274
    %357 = vmatprep.subr.bf16.mxu0 %v284
    %358 = vmatpush1.bf16.msra.mxu0 %v283
    %359 = vmatprep.subr.bf16.mxu0 0
    %360 = vmatpush1.bf16.msra.mxu0 0
    %361 = vmatprep.subr.bf16.mxu0 0
    %362 = vmatpush1.bf16.msra.mxu0 0
    %363 = vmatprep.subr.bf16.mxu0 0
    %364 = vmatpush1.bf16.msra.mxu0 0
    %365 = vmatprep.subr.bf16.mxu0 0
    %366 = vmatpush1.bf16.msra.mxu0 0
    %367 = vmatprep.subr.bf16.mxu0 0
    %368 = vmatpush1.bf16.msra.mxu0 0
    %369 = vmatprep.subr.bf16.mxu0 0
    %370 = vmatpush1.bf16.msra.mxu0 0
    %371 = vmatprep.subr.bf16.mxu0 0
    %372 = vmatpush1.bf16.msra.mxu0 0
    %373 = vmatprep.subr.bf16.mxu0 0
    %374 = vmatpush1.bf16.msra.mxu0 0
    %375 = vmatprep.subr.bf16.mxu0 0
    %376 = vmatpush1.bf16.msra.mxu0 0
    %377 = vmatprep.subr.bf16.mxu0 0
    %378 = vmatpush1.bf16.msra.mxu0 0
    %379 = vmatprep.subr.bf16.mxu0 0
    %380 = vmatpush1.bf16.msra.mxu0 0
    %381 = vmatprep.subr.bf16.mxu0 0
    %382 = vmatpush1.bf16.msra.mxu0 0
    %383 = vmatprep.subr.bf16.mxu0 0
    %384 = vmatpush1.bf16.msra.mxu0 0
    %385 = vmatprep.subr.bf16.mxu0 0
    %386 = vmatpush1.bf16.msra.mxu0 0
    %387 = vmatprep.mubr.bf16.mxu0 0
    %388 = vmatmul.mubr.bf16.gmra.mrb[0].mxu0 %v310
    %v389 = vpop.f32.mrb[0].mxu0
    %v390 = vadd.f32 0.0, %v389
    %v391 = vpop.f32.mrb[0].mxu0
    %v392 = vadd.f32 0.0, %v391
    %v393 = vpop.f32.mrb[0].mxu0
    %v394 = vadd.f32 0.0, %v393
    %v395 = vpop.f32.mrb[0].mxu0
    %v396 = vadd.f32 0.0, %v395
    %397 = vdwg.mxu0
    %398 = vmatprep.subr.bf16.mxu0 %v277
    %399 = vmatpush1.bf16.msra.mxu0 %v276
    %400 = vmatprep.subr.bf16.mxu0 %v286
    %401 = vmatpush1.bf16.msra.mxu0 %v285
    %402 = vmatprep.subr.bf16.mxu0 0
    %403 = vmatpush1.bf16.msra.mxu0 0
    %404 = vmatprep.subr.bf16.mxu0 0
    %405 = vmatpush1.bf16.msra.mxu0 0
    %406 = vmatprep.subr.bf16.mxu0 0
    %407 = vmatpush1.bf16.msra.mxu0 0
    %408 = vmatprep.subr.bf16.mxu0 0
    %409 = vmatpush1.bf16.msra.mxu0 0
    %410 = vmatprep.subr.bf16.mxu0 0
    %411 = vmatpush1.bf16.msra.mxu0 0
    %412 = vmatprep.subr.bf16.mxu0 0
    %413 = vmatpush1.bf16.msra.mxu0 0
    %414 = vmatprep.subr.bf16.mxu0 0
    %415 = vmatpush1.bf16.msra.mxu0 0
    %416 = vmatprep.subr.bf16.mxu0 0
    %417 = vmatpush1.bf16.msra.mxu0 0
    %418 = vmatprep.subr.bf16.mxu0 0
    %419 = vmatpush1.bf16.msra.mxu0 0
    %420 = vmatprep.subr.bf16.mxu0 0
    %421 = vmatpush1.bf16.msra.mxu0 0
    %422 = vmatprep.subr.bf16.mxu0 0
    %423 = vmatpush1.bf16.msra.mxu0 0
    %424 = vmatprep.subr.bf16.mxu0 0
    %425 = vmatpush1.bf16.msra.mxu0 0
    %426 = vmatprep.subr.bf16.mxu0 0
    %427 = vmatpush1.bf16.msra.mxu0 0
    %428 = vmatprep.subr.bf16.mxu0 0
    %429 = vmatpush1.bf16.msra.mxu0 0
    %430 = vmatprep.mubr.bf16.mxu0 0
    %431 = vmatmul.mubr.bf16.gmra.mrb[0].mxu0 %v310
    %v432 = vpop.f32.mrb[0].mxu0
    %v433 = vadd.f32 0.0, %v432
    %v434 = vpop.f32.mrb[0].mxu0
    %v435 = vadd.f32 0.0, %v434
    %v436 = vpop.f32.mrb[0].mxu0
    %v437 = vadd.f32 0.0, %v436
    %v438 = vpop.f32.mrb[0].mxu0
    %v439 = vadd.f32 0.0, %v438
    %440 = vdwg.mxu0
    %441 = vmatprep.subr.bf16.mxu0 %v279
    %442 = vmatpush1.bf16.msra.mxu0 %v278
    %443 = vmatprep.subr.bf16.mxu0 %v288
    %444 = vmatpush1.bf16.msra.mxu0 %v287
    %445 = vmatprep.subr.bf16.mxu0 0
    %446 = vmatpush1.bf16.msra.mxu0 0
    %447 = vmatprep.subr.bf16.mxu0 0
    %448 = vmatpush1.bf16.msra.mxu0 0
    %449 = vmatprep.subr.bf16.mxu0 0
    %450 = vmatpush1.bf16.msra.mxu0 0
    %451 = vmatprep.subr.bf16.mxu0 0
    %452 = vmatpush1.bf16.msra.mxu0 0
    %453 = vmatprep.subr.bf16.mxu0 0
    %454 = vmatpush1.bf16.msra.mxu0 0
    %455 = vmatprep.subr.bf16.mxu0 0
    %456 = vmatpush1.bf16.msra.mxu0 0
    %457 = vmatprep.subr.bf16.mxu0 0
    %458 = vmatpush1.bf16.msra.mxu0 0
    %459 = vmatprep.subr.bf16.mxu0 0
    %460 = vmatpush1.bf16.msra.mxu0 0
    %461 = vmatprep.subr.bf16.mxu0 0
    %462 = vmatpush1.bf16.msra.mxu0 0
    %463 = vmatprep.subr.bf16.mxu0 0
    %464 = vmatpush1.bf16.msra.mxu0 0
    %465 = vmatprep.subr.bf16.mxu0 0
    %466 = vmatpush1.bf16.msra.mxu0 0
    %467 = vmatprep.subr.bf16.mxu0 0
    %468 = vmatpush1.bf16.msra.mxu0 0
    %469 = vmatprep.subr.bf16.mxu0 0
    %470 = vmatpush1.bf16.msra.mxu0 0
    %471 = vmatprep.subr.bf16.mxu0 0
    %472 = vmatpush1.bf16.msra.mxu0 0
    %473 = vmatprep.mubr.bf16.mxu0 0
    %474 = vmatmul.mubr.bf16.gmra.mrb[0].mxu0 %v310
    %v475 = vpop.f32.mrb[0].mxu0
    %v476 = vadd.f32 0.0, %v475
    %v477 = vpop.f32.mrb[0].mxu0
    %v478 = vadd.f32 0.0, %v477
    %v479 = vpop.f32.mrb[0].mxu0
    %v480 = vadd.f32 0.0, %v479
    %v481 = vpop.f32.mrb[0].mxu0
    %v482 = vadd.f32 0.0, %v481
    %483 = vdwg.mxu0
    %484 = vmatprep.subr.bf16.mxu0 0
    %485 = vmatpush1.bf16.msra.mxu0 %v280
    %486 = vmatprep.subr.bf16.mxu0 0
    %487 = vmatpush1.bf16.msra.mxu0 %v289
    %488 = vmatprep.subr.bf16.mxu0 0
    %489 = vmatpush1.bf16.msra.mxu0 0
    %490 = vmatprep.subr.bf16.mxu0 0
    %491 = vmatpush1.bf16.msra.mxu0 0
    %492 = vmatprep.subr.bf16.mxu0 0
    %493 = vmatpush1.bf16.msra.mxu0 0
    %494 = vmatprep.subr.bf16.mxu0 0
    %495 = vmatpush1.bf16.msra.mxu0 0
    %496 = vmatprep.subr.bf16.mxu0 0
    %497 = vmatpush1.bf16.msra.mxu0 0
    %498 = vmatprep.subr.bf16.mxu0 0
    %499 = vmatpush1.bf16.msra.mxu0 0
    %500 = vmatprep.subr.bf16.mxu0 0
    %501 = vmatpush1.bf16.msra.mxu0 0
    %502 = vmatprep.subr.bf16.mxu0 0
    %503 = vmatpush1.bf16.msra.mxu0 0
    %504 = vmatprep.subr.bf16.mxu0 0
    %505 = vmatpush1.bf16.msra.mxu0 0
    %506 = vmatprep.subr.bf16.mxu0 0
    %507 = vmatpush1.bf16.msra.mxu0 0
    %508 = vmatprep.subr.bf16.mxu0 0
    %509 = vmatpush1.bf16.msra.mxu0 0
    %510 = vmatprep.subr.bf16.mxu0 0
    %511 = vmatpush1.bf16.msra.mxu0 0
    %512 = vmatprep.subr.bf16.mxu0 0
    %513 = vmatpush1.bf16.msra.mxu0 0
    %514 = vmatprep.subr.bf16.mxu0 0
    %515 = vmatpush1.bf16.msra.mxu0 0
    %516 = vmatprep.mubr.bf16.mxu0 0
    %517 = vmatmul.mubr.bf16.gmra.mrb[0].mxu0 %v310
    %v518 = vpop.f32.mrb[0].mxu0
    %v519 = vadd.f32 0.0, %v518
    %v520 = vpop.f32.mrb[0].mxu0
    %v521 = vpop.f32.mrb[0].mxu0
    %v522 = vadd.f32 0.0, %v521
    %v523 = vpop.f32.mrb[0].mxu0
    %524 = vdwg.mxu0
    %v527 = vrot.slane %v349, 1
    %v528 = vrot.slane %v353, 1
    %v531 = vadd.f32 %v347, %v527
    %v532 = vadd.f32 %v351, %v528
    %vm533 = vcmask 1046528
    %v534 = vsel %vm533, %v531, -inf
    %v535 = vrot.slane %v534, 4
    %v536 = vmax.f32 %v534, %v535
    %v537 = vrot.slane %v536, 2
    %v538 = vmax.f32 %v536, %v537
    %v539 = vrot.slane %v538, 1
    %v540 = vmax.f32 %v538, %v539
    %v541 = vsel %vm533, %v532, -inf
    %v542 = vrot.slane %v541, 4
    %v543 = vmax.f32 %v541, %v542
    %v544 = vrot.slane %v543, 2
    %v545 = vmax.f32 %v543, %v544
    %v546 = vrot.slane %v545, 1
    %v547 = vmax.f32 %v545, %v546
    %v548 = vld [vmem:[%s3] sm:$0x1]
    %v549 = vlaneseq
    %v550 = vshrl.u32 %v549, 7
    %v551 = vsub.s32 0, %v550
    %v552 = vrot.slane %v548, %v551
    %v553 = vadd.f32 %v540, %v552
    %v554 = vadd.f32 %v547, %v552
    %v555 = vmax.f32 %v553, 0.0
    %v556 = vmax.f32 %v554, 0.0
    %v557 = vpack.c.bf16 %v555, %v555
    %v558 = vpack.c.bf16 %v556, %v556
    %v561 = vrot.slane %v392, 1
    %v562 = vrot.slane %v396, 1
    %v565 = vadd.f32 %v390, %v561
    %v566 = vadd.f32 %v394, %v562
    %v569 = vrot.slane %v433, 2
    %v570 = vrot.slane %v437, 2
    %v573 = vadd.f32 %v565, %v569
    %v574 = vadd.f32 %v566, %v570
    %vm575 = vcmask 1045504
    %v576 = vsel %vm575, %v573, -inf
    %v577 = vrot.slane %v576, 4
    %v578 = vmax.f32 %v576, %v577
    %v579 = vrot.slane %v578, 2
    %v580 = vmax.f32 %v578, %v579
    %v581 = vrot.slane %v580, 1
    %v582 = vmax.f32 %v580, %v581
    %v583 = vsel %vm575, %v574, -inf
    %v584 = vrot.slane %v583, 4
    %v585 = vmax.f32 %v583, %v584
    %v586 = vrot.slane %v585, 2
    %v587 = vmax.f32 %v585, %v586
    %v588 = vrot.slane %v587, 1
    %v589 = vmax.f32 %v587, %v588
    %v590 = vld [vmem:[%s3 + $0x1] sm:$0x1]
    %v591 = vlaneseq
    %v592 = vshrl.u32 %v591, 7
    %v593 = vsub.s32 0, %v592
    %v594 = vrot.slane %v590, %v593
    %v595 = vadd.f32 %v582, %v594
    %v596 = vadd.f32 %v589, %v594
    %v597 = vmax.f32 %v595, 0.0
    %v598 = vmax.f32 %v596, 0.0
    %v599 = vpack.c.bf16 %v597, %v597
    %v600 = vpack.c.bf16 %v598, %v598
    %v603 = vrot.slane %v476, 1
    %v604 = vrot.slane %v480, 1
    %v607 = vadd.f32 %v435, %v603
    %v608 = vadd.f32 %v439, %v604
    %v611 = vrot.slane %v478, 2
    %v612 = vrot.slane %v482, 2
    %v615 = vadd.f32 %v607, %v611
    %v616 = vadd.f32 %v608, %v612
    %v619 = vrot.slane %v519, 3
    %v620 = vrot.slane %v522, 3
    %v623 = vadd.f32 %v615, %v619
    %v624 = vadd.f32 %v616, %v620
    %vm625 = vcmask 1044480
    %v626 = vsel %vm625, %v623, -inf
    %v627 = vrot.slane %v626, 4
    %v628 = vmax.f32 %v626, %v627
    %v629 = vrot.slane %v628, 2
    %v630 = vmax.f32 %v628, %v629
    %v631 = vrot.slane %v630, 1
    %v632 = vmax.f32 %v630, %v631
    %v633 = vsel %vm625, %v624, -inf
    %v634 = vrot.slane %v633, 4
    %v635 = vmax.f32 %v633, %v634
    %v636 = vrot.slane %v635, 2
    %v637 = vmax.f32 %v635, %v636
    %v638 = vrot.slane %v637, 1
    %v639 = vmax.f32 %v637, %v638
    %v640 = vld [vmem:[%s3 + $0x2] sm:$0x1]
    %v641 = vlaneseq
    %v642 = vshrl.u32 %v641, 7
    %v643 = vsub.s32 0, %v642
    %v644 = vrot.slane %v640, %v643
    %v645 = vadd.f32 %v632, %v644
    %v646 = vadd.f32 %v639, %v644
    %v647 = vmax.f32 %v645, 0.0
    %v648 = vmax.f32 %v646, 0.0
    %v649 = vpack.c.bf16 %v647, %v647
    %v650 = vpack.c.bf16 %v648, %v648
    %v653 = vunpack.c.l.b16 %v557
    %v654 = vunpack.c.l.b16 %v558
    %v655 = vrot.slane %v654, 7
    %vm656 = vcmask 1041409
    %v657 = vsel %vm656, %v655, %v653
    %v658 = vpack.c.b16 %v657, %v657
    %v662 = vunpack.c.l.b16 %v599
    %v663 = vunpack.c.l.b16 %v600
    %v664 = vrot.slane %v663, 7
    %v665 = vsel %vm656, %v664, %v662
    %v666 = vpack.c.b16 %v665, %v665
    %v670 = vunpack.c.l.b16 %v649
    %v671 = vunpack.c.l.b16 %v650
    %v672 = vrot.slane %v671, 7
    %v673 = vsel %vm656, %v672, %v670
    %v674 = vpack.c.b16 %v673, %v673
    %v676 = vld [vmem:[#allocation5] sm:$0xf]
    %v677 = vld [vmem:[#allocation5 + $0x4] sm:$0xf]
    %v678 = vld [vmem:[#allocation5 + $0x8] sm:$0xf]
    %v679 = vld [vmem:[#allocation5 + $0xc] sm:$0xf]
    %v680 = vld [vmem:[#allocation5 + $0x10] sm:$0xf]
    %v681 = vld [vmem:[#allocation5 + $0x14] sm:$0xf]
    %v682 = vld [vmem:[#allocation5 + $0x18] sm:$0xf]
    %v683 = vld [vmem:[#allocation5 + $0x1c] sm:$0xf]
    %v684 = vld [vmem:[#allocation5 + $0x20] sm:$0xf]
    %v685 = vld [vmem:[#allocation5 + $0x24] sm:$0xf]
    %v686 = vld [vmem:[#allocation5 + $0x28] sm:$0xf]
    %v687 = vld [vmem:[#allocation5 + $0x2c] sm:$0xf]
    %v688 = vld [vmem:[#allocation5 + $0x30] sm:$0xf]
    %v689 = vld [vmem:[#allocation5 + $0x34] sm:$0xf]
    %v690 = vld [vmem:[#allocation5 + $0x38] sm:$0xf]
    %v691 = vld [vmem:[#allocation5 + $0x3c] sm:$0xf]
    %v692 = vld [vmem:[#allocation5 + $0x40] sm:$0xf]
    %v693 = vld [vmem:[#allocation5 + $0x44] sm:$0xf]
    %v694 = vld [vmem:[#allocation5 + $0x48] sm:$0xf]
    %v695 = vld [vmem:[#allocation5 + $0x4c] sm:$0xf]
    %v696 = vld [vmem:[#allocation5 + $0x50] sm:$0xf]
    %v697 = vld [vmem:[#allocation5 + $0x54] sm:$0xf]
    %v698 = vld [vmem:[#allocation5 + $0x58] sm:$0xf]
    %v699 = vld [vmem:[#allocation5 + $0x5c] sm:$0xf]
    %v700 = vld [vmem:[#allocation5 + $0x60] sm:$0xf]
    %v701 = vld [vmem:[#allocation5 + $0x64] sm:$0xf]
    %v702 = vld [vmem:[#allocation5 + $0x68] sm:$0xf]
    %v703 = vld [vmem:[#allocation5 + $0x6c] sm:$0xf]
    %v704 = vld [vmem:[#allocation5 + $0x70] sm:$0xf]
    %v705 = vld [vmem:[#allocation5 + $0x74] sm:$0xf]
    %v706 = vld [vmem:[#allocation5 + $0x78] sm:$0xf]
    %v707 = vld [vmem:[#allocation5 + $0x7c] sm:$0xf]
    %v708 = vld [vmem:[#allocation5 + $0x80] sm:$0xf]
    %v709 = vld [vmem:[#allocation5 + $0x84] sm:$0xf]
    %v710 = vld [vmem:[#allocation5 + $0x88] sm:$0xf]
    %v711 = vld [vmem:[#allocation5 + $0x8c] sm:$0xf]
    %v712 = vld [vmem:[#allocation5 + $0x90] sm:$0xf]
    %v713 = vld [vmem:[#allocation5 + $0x94] sm:$0xf]
    %v714 = vld [vmem:[#allocation5 + $0x98] sm:$0xf]
    %v715 = vld [vmem:[#allocation5 + $0x9c] sm:$0xf]
    %v716 = vld [vmem:[#allocation5 + $0xa0] sm:$0xf]
    %v717 = vld [vmem:[#allocation5 + $0xa4] sm:$0xf]
    %v718 = vld [vmem:[#allocation5 + $0xa8] sm:$0xf]
    %v719 = vld [vmem:[#allocation5 + $0xac] sm:$0xf]
    %v720 = vld [vmem:[#allocation5 + $0xb0] sm:$0xf]
    %v721 = vld [vmem:[#allocation5 + $0xb4] sm:$0xf]
    %v722 = vld [vmem:[#allocation5 + $0xb8] sm:$0xf]
    %v723 = vld [vmem:[#allocation5 + $0xbc] sm:$0xf]
    %v724 = vld [vmem:[%s5] sm:$0x1]
    %v726 = vlaneseq
    %v727 = vshrl.u32 %v726, 7
    %v728 = vsub.s32 0, %v727
    %v729 = vrot.slane %v724, %v728
    %v779 = vunpack.c.l.b16 %v676
    %v780 = vunpack.c.l.b16 %v677
    %v781 = vunpack.c.l.b16 %v678
    %v782 = vunpack.c.l.b16 %v679
    %v783 = vunpack.c.l.b16 %v680
    %v784 = vunpack.c.l.b16 %v681
    %v785 = vunpack.c.l.b16 %v682
    %v786 = vunpack.c.l.b16 %v683
    %v787 = vunpack.c.l.b16 %v684
    %v788 = vunpack.c.l.b16 %v685
    %v789 = vunpack.c.l.b16 %v686
    %v790 = vunpack.c.l.b16 %v687
    %v791 = vunpack.c.l.b16 %v688
    %v792 = vunpack.c.l.b16 %v689
    %v793 = vunpack.c.l.b16 %v690
    %v794 = vunpack.c.l.b16 %v691
    %v795 = vunpack.c.l.b16 %v692
    %v796 = vunpack.c.l.b16 %v693
    %v797 = vunpack.c.l.b16 %v694
    %v798 = vunpack.c.l.b16 %v695
    %v799 = vunpack.c.l.b16 %v696
    %v800 = vunpack.c.l.b16 %v697
    %v801 = vunpack.c.l.b16 %v698
    %v802 = vunpack.c.l.b16 %v699
    %v803 = vunpack.c.l.b16 %v700
    %v804 = vunpack.c.l.b16 %v701
    %v805 = vunpack.c.l.b16 %v702
    %v806 = vunpack.c.l.b16 %v703
    %v807 = vunpack.c.l.b16 %v704
    %v808 = vunpack.c.l.b16 %v705
    %v809 = vunpack.c.l.b16 %v706
    %v810 = vunpack.c.l.b16 %v707
    %v811 = vunpack.c.l.b16 %v708
    %v812 = vunpack.c.l.b16 %v709
    %v813 = vunpack.c.l.b16 %v710
    %v814 = vunpack.c.l.b16 %v711
    %v815 = vunpack.c.l.b16 %v712
    %v816 = vunpack.c.l.b16 %v713
    %v817 = vunpack.c.l.b16 %v714
    %v818 = vunpack.c.l.b16 %v715
    %v819 = vunpack.c.l.b16 %v716
    %v820 = vunpack.c.l.b16 %v717
    %v821 = vunpack.c.l.b16 %v718
    %v822 = vunpack.c.l.b16 %v719
    %v823 = vunpack.c.l.b16 %v720
    %v824 = vunpack.c.l.b16 %v721
    %v825 = vunpack.c.l.b16 %v722
    %v826 = vunpack.c.l.b16 %v723
    %v827 = vpack.c.b16 %v780, %v779
    %v828 = vpack.c.b16 %v782, %v781
    %v829 = vpack.c.b16 %v784, %v783
    %v830 = vpack.c.b16 %v786, %v785
    %v831 = vpack.c.b16 %v788, %v787
    %v832 = vpack.c.b16 %v790, %v789
    %v833 = vpack.c.b16 %v792, %v791
    %v834 = vpack.c.b16 %v794, %v793
    %v835 = vpack.c.b16 %v796, %v795
    %v836 = vpack.c.b16 %v798, %v797
    %v837 = vpack.c.b16 %v800, %v799
    %v838 = vpack.c.b16 %v802, %v801
    %v839 = vpack.c.b16 %v804, %v803
    %v840 = vpack.c.b16 %v806, %v805
    %v841 = vpack.c.b16 %v808, %v807
    %v842 = vpack.c.b16 %v810, %v809
    %v843 = vpack.c.b16 %v812, %v811
    %v844 = vpack.c.b16 %v814, %v813
    %v845 = vpack.c.b16 %v816, %v815
    %v846 = vpack.c.b16 %v818, %v817
    %v847 = vpack.c.b16 %v820, %v819
    %v848 = vpack.c.b16 %v822, %v821
    %v849 = vpack.c.b16 %v824, %v823
    %v850 = vpack.c.b16 %v826, %v825
    %875 = vmatprep.subr.bf16.mxu0 0
    %876 = vmatpush1.bf16.msra.mxu0 %v827
    %877 = vmatprep.subr.bf16.mxu0 0
    %878 = vmatpush1.bf16.msra.mxu0 %v828
    %879 = vmatprep.subr.bf16.mxu0 0
    %880 = vmatpush1.bf16.msra.mxu0 %v829
    %881 = vmatprep.subr.bf16.mxu0 0
    %882 = vmatpush1.bf16.msra.mxu0 %v830
    %883 = vmatprep.subr.bf16.mxu0 0
    %884 = vmatpush1.bf16.msra.mxu0 %v831
    %885 = vmatprep.subr.bf16.mxu0 0
    %886 = vmatpush1.bf16.msra.mxu0 %v832
    %887 = vmatprep.subr.bf16.mxu0 0
    %888 = vmatpush1.bf16.msra.mxu0 %v833
    %889 = vmatprep.subr.bf16.mxu0 0
    %890 = vmatpush1.bf16.msra.mxu0 %v834
    %891 = vmatprep.subr.bf16.mxu0 0
    %892 = vmatpush1.bf16.msra.mxu0 %v835
    %893 = vmatprep.subr.bf16.mxu0 0
    %894 = vmatpush1.bf16.msra.mxu0 %v836
    %895 = vmatprep.subr.bf16.mxu0 0
    %896 = vmatpush1.bf16.msra.mxu0 %v837
    %897 = vmatprep.subr.bf16.mxu0 0
    %898 = vmatpush1.bf16.msra.mxu0 %v838
    %899 = vmatprep.subr.bf16.mxu0 0
    %900 = vmatpush1.bf16.msra.mxu0 %v839
    %901 = vmatprep.subr.bf16.mxu0 0
    %902 = vmatpush1.bf16.msra.mxu0 %v840
    %903 = vmatprep.subr.bf16.mxu0 0
    %904 = vmatpush1.bf16.msra.mxu0 %v841
    %905 = vmatprep.subr.bf16.mxu0 0
    %906 = vmatpush1.bf16.msra.mxu0 %v842
    %907 = vmatprep.mubr.bf16.mxu0 %v666
    %908 = vmatmul.mubr.bf16.gmra.mrb[0].mxu0 %v658
    %v909 = vpop.f32.mrb[0].mxu0
    %v910 = vadd.f32 %v729, %v909
    %v911 = vpop.f32.mrb[0].mxu0
    %v912 = vpop.f32.mrb[0].mxu0
    %v913 = vpop.f32.mrb[0].mxu0
    %914 = vdwg.mxu0
    %915 = vmatprep.subr.bf16.mxu0 0
    %916 = vmatpush1.bf16.msra.mxu0 %v843
    %917 = vmatprep.subr.bf16.mxu0 0
    %918 = vmatpush1.bf16.msra.mxu0 %v844
    %919 = vmatprep.subr.bf16.mxu0 0
    %920 = vmatpush1.bf16.msra.mxu0 %v845
    %921 = vmatprep.subr.bf16.mxu0 0
    %922 = vmatpush1.bf16.msra.mxu0 %v846
    %923 = vmatprep.subr.bf16.mxu0 0
    %924 = vmatpush1.bf16.msra.mxu0 %v847
    %925 = vmatprep.subr.bf16.mxu0 0
    %926 = vmatpush1.bf16.msra.mxu0 %v848
    %927 = vmatprep.subr.bf16.mxu0 0
    %928 = vmatpush1.bf16.msra.mxu0 %v849
    %929 = vmatprep.subr.bf16.mxu0 0
    %930 = vmatpush1.bf16.msra.mxu0 %v850
    %931 = vmatprep.subr.bf16.mxu0 0
    %932 = vmatpush1.bf16.msra.mxu0 0
    %933 = vmatprep.subr.bf16.mxu0 0
    %934 = vmatpush1.bf16.msra.mxu0 0
    %935 = vmatprep.subr.bf16.mxu0 0
    %936 = vmatpush1.bf16.msra.mxu0 0
    %937 = vmatprep.subr.bf16.mxu0 0
    %938 = vmatpush1.bf16.msra.mxu0 0
    %939 = vmatprep.subr.bf16.mxu0 0
    %940 = vmatpush1.bf16.msra.mxu0 0
    %941 = vmatprep.subr.bf16.mxu0 0
    %942 = vmatpush1.bf16.msra.mxu0 0
    %943 = vmatprep.subr.bf16.mxu0 0
    %944 = vmatpush1.bf16.msra.mxu0 0
    %945 = vmatprep.subr.bf16.mxu0 0
    %946 = vmatpush1.bf16.msra.mxu0 0
    %947 = vmatprep.mubr.bf16.mxu0 0
    %948 = vmatmul.mubr.bf16.gmra.mrb[0].mxu0 %v674
    %v949 = vpop.f32.mrb[0].mxu0
    %v950 = vadd.f32 %v910, %v949
    %v951 = vpop.f32.mrb[0].mxu0
    %v952 = vpop.f32.mrb[0].mxu0
    %v953 = vpop.f32.mrb[0].mxu0
    %954 = vdwg.mxu0
    %955 = vst [vmem:[#allocation7] sm:$0x3] %v950
    // Predicated region
    $region34: #{tpu_custom_call.1} parent=1 // pred_check
      _
    $region35: #{tpu_custom_call.1} parent=1 // pred_check_branch
      %957 = sbr.rel (0) target = $region37
    $region36: #{tpu_custom_call.1} parent=1 // pred_region
      %s959 = ssub.s32 32, 32
      %960 = vsyncadd [#allocation4], %s959
      %s962 = sshll.u32 [#allocation7], 4
      %s963 = int_to_ptr.vmem [resolvable:$true] %s962
      %965 = dma.vmem_to_hbm [thread:$0]  %s963, 32, %s6, [#allocation4]
    $region37: #{tpu_custom_call.1} parent=1 // pred_fallthru
      _
    // Predicated region
    $region38: #{tpu_custom_call.1} parent=1 // pred_check
      _
    $region39: #{tpu_custom_call.1} parent=1 // pred_check_branch
      %967 = sbr.rel (0) target = $region41
    $region40: #{tpu_custom_call.1} parent=1 // pred_region
      %968 = dma.done [#allocation4], 32
    $region41: #{tpu_custom_call.1} parent=1 // pred_fallthru
      _
    %969 = vsyncpa [#allocation3], 1
    %970 = vsyncpa [#allocation6], 1
    %971 = vsyncpa [#allocation4], 1

</llo_original>
